<compile_context>
chip_gen: v6e
topology: v6e:2x2x1
jax: 0.10.0
libtpu: 0.0.40
codegen_flags: <defaults>
</compile_context>

<pallas_src>
import functools
import math

import jax
import jax.numpy as jnp
from jax import lax
from jax.experimental import pallas as pl
from jax.experimental.pallas import tpu as pltpu

EPS = 1e-8
LANE_W = 512                          # lane width of the VPU accumulators (multiple of 128)
LOG10_SCALE = 10.0 / math.log(10.0)   # 10 / ln(10)
_TARGET_BLOCK_BYTES = 4 * 1024 * 1024 # ~2-4 MiB per-input blocks reach ~85%+ of HBM roofline
_MAX_UNROLL = 4


def _round_up(x, m):
    return ((x + m - 1) // m) * m


def _cdiv(a, b):
    return -(-a // b)


def _vmem_capacity():
    try:
        return int(pltpu.get_tpu_info().vmem_capacity_bytes)  # 128 MiB v5e/v6e, 64 MiB v7x
    except Exception:
        return 64 * 1024 * 1024                               # conservative (v7x-sized) fallback


def sdr_loss_kernel(true_ref, pred_ref, sig_ref, err_ref, sig_acc, err_acc, *,
                    n_chunks, tile_t, seq_len, unroll):
    p = pl.program_id(1)
    t = pl.program_id(2)
    n_t = pl.num_programs(2)

    @pl.when(t == 0)
    def _init():
        sig_acc[...] = jnp.zeros_like(sig_acc)
        err_acc[...] = jnp.zeros_like(err_acc)

    # Global sample index of each lane of this *logical* time tile.  Logical
    # tiles past the last real tile are clamped to an in-bounds DMA by the
    # index_map but fully masked here, so they contribute exactly zero.
    rows = true_ref.shape[0]
    tile_start = (p * n_t + t) * tile_t
    pos0 = tile_start + lax.broadcasted_iota(jnp.int32, (rows, LANE_W), 1)  # hoisted

    def body(c, carry):
        sig, err = carry
        off = pl.multiple_of(c * LANE_W, LANE_W)
        s = true_ref[:, pl.ds(off, LANE_W)].astype(jnp.float32)
        y = pred_ref[:, pl.ds(off, LANE_W)].astype(jnp.float32)
        mask = (pos0 + off) < seq_len          # mask overhang BEFORE squaring
        s = jnp.where(mask, s, 0.0)
        y = jnp.where(mask, y, 0.0)
        d = s - y
        return sig + s * s, err + d * d

    sig, err = lax.fori_loop(0, n_chunks, body,
                             (sig_acc[...], err_acc[...]), unroll=unroll)
    sig_acc[...] = sig
    err_acc[...] = err

    @pl.when(t == n_t - 1)
    def _finalize():
        # Single cross-lane (XLU) reduction per (batch tile, time split).
        sig_ref[0, :, :] = jnp.sum(sig_acc[...], axis=-1, keepdims=True)
        err_ref[0, :, :] = jnp.sum(err_acc[...], axis=-1, keepdims=True)


def sdr_loss(s_true, s_pred, *, tile_b=None, tile_t=None):
    """Pallas implementation of SDRLoss.forward(s_true, s_pred)."""
    assert s_true.shape == s_pred.shape and s_true.ndim == 2
    B, T = s_true.shape
    itemsize = jnp.dtype(s_true.dtype).itemsize

    vmem_cap = _vmem_capacity()
    max_block_bytes = min(8 * 1024 * 1024, vmem_cap // 8)   # 2 inputs x 2 buffers + headroom
    block_bytes = min(_TARGET_BLOCK_BYTES, max_block_bytes)

    T_lane = _round_up(max(T, 1), LANE_W)
    row_bytes = T_lane * itemsize

    # --- batch tiling (sublane axis): multiple of 8 (or full B when B < 8);
    #     grown for short sequences so each block still moves ~block_bytes.
    if tile_b is None:
        if B < 8:
            tile_b = B
        else:
            rows_fit = max(8, (block_bytes // max(row_bytes, 1)) // 8 * 8)
            tile_b = int(min((B // 8) * 8, rows_fit, 2048))
    else:
        assert tile_b % 8 == 0 or tile_b == B, "tile_b must be a multiple of 8 (or == B)"

    # --- time tiling (lane / reduction axis): multiple of LANE_W, dtype-aware
    #     VMEM budget, clamped against the generation's capacity.
    max_tile_t = max(LANE_W, (max_block_bytes // (tile_b * itemsize)) // LANE_W * LANE_W)
    if tile_t is None:
        fit = max(LANE_W, (block_bytes // (tile_b * itemsize)) // LANE_W * LANE_W)
        tile_t = min(T_lane, fit)
        n_tt = _cdiv(T, tile_t)
        tile_t = _round_up(_cdiv(T, n_tt), LANE_W)           # balanced tiles
    else:
        assert tile_t % LANE_W == 0, f"tile_t must be a multiple of {LANE_W}"
    tile_t = min(tile_t, max_tile_t)
    n_tt = _cdiv(T, tile_t)                                  # total logical time tiles
    n_chunks = tile_t // LANE_W

    n_b = _cdiv(B, tile_b)
    # Guarantee >=2-way parallel extent so both v7x TensorCores get work even
    # at tiny batch; harmless on 1-TC chips (one extra init/finalize pair).
    n_p = 2 if (n_b == 1 and n_tt >= 2) else 1
    n_t = _cdiv(n_tt, n_p)
    B_out = n_b * tile_b

    block_in_bytes = tile_b * tile_t * itemsize
    vmem_limit = int(min(vmem_cap, 4 * block_in_bytes + (8 << 20)))  # actual need + slack

    kernel = functools.partial(
        sdr_loss_kernel, n_chunks=n_chunks, tile_t=tile_t, seq_len=T,
        unroll=int(min(_MAX_UNROLL, n_chunks)))

    def in_map(b, p, t):
        # Clamp so the DMA of any trailing (fully-masked) logical tile stays in bounds.
        return (b, jnp.minimum(p * n_t + t, n_tt - 1))

    sig, err = pl.pallas_call(
        kernel,
        out_shape=(jax.ShapeDtypeStruct((n_p, B_out, 1), jnp.float32),
                   jax.ShapeDtypeStruct((n_p, B_out, 1), jnp.float32)),
        grid_spec=pltpu.PrefetchScalarGridSpec(
            num_scalar_prefetch=0,
            grid=(n_b, n_p, n_t),                  # (parallel, parallel, reduction-last)
            in_specs=[
                pl.BlockSpec((tile_b, tile_t), in_map),
                pl.BlockSpec((tile_b, tile_t), in_map),
            ],
            out_specs=[
                pl.BlockSpec((1, tile_b, 1), lambda b, p, t: (p, b, 0)),
                pl.BlockSpec((1, tile_b, 1), lambda b, p, t: (p, b, 0)),
            ],
            scratch_shapes=[
                pltpu.VMEM((tile_b, LANE_W), jnp.float32),
                pltpu.VMEM((tile_b, LANE_W), jnp.float32),
            ],
        ),
        compiler_params=pltpu.CompilerParams(
            dimension_semantics=("parallel", "parallel", "arbitrary"),
            vmem_limit_bytes=vmem_limit,
        ),
        cost_estimate=pl.CostEstimate(
            flops=5 * B * T,
            transcendentals=0,
            bytes_accessed=2 * B * T * itemsize + 2 * n_p * B_out * 4,
        ),
    )(s_true, s_pred)

    # Combine partial sums (trivial O(B) work), drop padded/garbage batch rows,
    # and do the log10 + mean in JAX.
    sig_tot = jnp.sum(sig[:, :B, 0], axis=0)
    err_tot = jnp.sum(err[:, :B, 0], axis=0)
    sdr = LOG10_SCALE * jnp.log(sig_tot / (err_tot + EPS) + EPS)
    return -jnp.mean(sdr)


def sdr_loss_ref(s_true, s_pred):
    sig = jnp.sum(s_true * s_true, axis=-1)
    err = jnp.sum((s_true - s_pred) ** 2, axis=-1)
    sdr = 10.0 * jnp.log10(sig / (err + EPS) + EPS)
    return -jnp.mean(sdr)


if __name__ == "__main__":
    key = jax.random.PRNGKey(0)

    def check(B, T, **kw):
        k1, k2 = jax.random.split(jax.random.fold_in(key, B * 100003 + T))
        s_true = jax.random.normal(k1, (B, T), dtype=jnp.float32)
        s_pred = s_true + 0.1 * jax.random.normal(k2, (B, T), dtype=jnp.float32)
        loss = sdr_loss(s_true, s_pred, **kw)
        jax.block_until_ready(loss)
        ref = sdr_loss_ref(s_true, s_pred)
        assert jnp.allclose(loss, ref, rtol=1e-4, atol=1e-4), (B, T, float(loss), float(ref))

    check(4, 2048)                # exact tiles, single block
    check(12, 1000)               # batch-row + time overhang handled by masking (no jnp.pad)
    check(5, 2500, tile_t=512)    # 2-way parallel time split, odd tile count (clamped tail tile)
    print("KERNEL_OK")
</pallas_src>

<mosaic_0001>
module attributes {stable_mosaic.version = 11 : i64} {
  func.func @sdr_loss_kernel(%arg0: i32, %arg1: i32, %arg2: i32, %arg3: memref<4x2048xf32, #tpu.memory_space<vmem>>, %arg4: memref<4x2048xf32, #tpu.memory_space<vmem>>, %arg5: memref<1x4x1xf32, #tpu.memory_space<vmem>>, %arg6: memref<1x4x1xf32, #tpu.memory_space<vmem>>, %arg7: memref<4x512xf32, #tpu.memory_space<vmem>>, %arg8: memref<4x512xf32, #tpu.memory_space<vmem>>) attributes {dimension_semantics = [#tpu.dimension_semantics<parallel>, #tpu.dimension_semantics<parallel>, #tpu.dimension_semantics<arbitrary>], iteration_bounds = array<i64: 1, 1, 1>, scalar_prefetch = 0 : i64, scratch_operands = 2 : i64, tpu.core_type = #tpu.core_type<tc>, window_params = [{transform_indices = @transform_0, window_bounds = array<i64: 4, 2048>}, {transform_indices = @transform_1, window_bounds = array<i64: 4, 2048>}, {transform_indices = @transform_2, window_bounds = array<i64: 1, 4, 1>}, {transform_indices = @transform_3, window_bounds = array<i64: 1, 4, 1>}]} {
    %c0_i32 = arith.constant 0 : i32
    %0 = arith.cmpi eq, %arg2, %c0_i32 : i32
    %1 = arith.extui %0 : i1 to i32
    %c0_i32_0 = arith.constant 0 : i32
    %2 = arith.cmpi ne, %1, %c0_i32_0 : i32
    scf.if %2 {
      %cst_34 = arith.constant 0.000000e+00 : f32
      %92 = vector.broadcast %cst_34 : f32 to vector<4x512xf32>
      %c0_35 = arith.constant 0 : index
      %c0_36 = arith.constant 0 : index
      %93 = vector.load %arg7[%c0_35, %c0_36] : memref<4x512xf32, #tpu.memory_space<vmem>>, vector<4x512xf32>
      tpu.vector_store %arg7[%c0_35, %c0_36], %92 {strides = array<i32>} : memref<4x512xf32, #tpu.memory_space<vmem>>, vector<4x512xf32>,
      %cst_37 = arith.constant 0.000000e+00 : f32
      %94 = vector.broadcast %cst_37 : f32 to vector<4x512xf32>
      %c0_38 = arith.constant 0 : index
      %c0_39 = arith.constant 0 : index
      %95 = vector.load %arg8[%c0_38, %c0_39] : memref<4x512xf32, #tpu.memory_space<vmem>>, vector<4x512xf32>
      tpu.vector_store %arg8[%c0_38, %c0_39], %94 {strides = array<i32>} : memref<4x512xf32, #tpu.memory_space<vmem>>, vector<4x512xf32>,
    } else {
    }
    %c1_i32 = arith.constant 1 : i32
    %3 = arith.muli %arg1, %c1_i32 : i32
    %4 = arith.addi %3, %arg2 : i32
    %c2048_i32 = arith.constant 2048 : i32
    %5 = arith.muli %4, %c2048_i32 : i32
    %6 = tpu.iota {dimensions = array<i32: 1>} : vector<4x512xi32>
    %7 = vector.broadcast %5 : i32 to vector<4x512xi32>
    %8 = arith.addi %7, %6 : vector<4x512xi32>
    %c0 = arith.constant 0 : index
    %c0_1 = arith.constant 0 : index
    %9 = vector.load %arg7[%c0, %c0_1] : memref<4x512xf32, #tpu.memory_space<vmem>>, vector<4x512xf32>
    %c0_2 = arith.constant 0 : index
    %c0_3 = arith.constant 0 : index
    %10 = vector.load %arg8[%c0_2, %c0_3] : memref<4x512xf32, #tpu.memory_space<vmem>>, vector<4x512xf32>
    %c0_i32_4 = arith.constant 0 : i32
    %c512_i32 = arith.constant 512 : i32
    %11 = arith.muli %c0_i32_4, %c512_i32 : i32
    %12 = tpu.assume_multiple %11, 512 : i32
    %c0_5 = arith.constant 0 : index
    %13 = arith.index_cast %12 : i32 to index
    %14 = vector.load %arg3[%c0_5, %13] : memref<4x2048xf32, #tpu.memory_space<vmem>>, vector<4x512xf32>
    %c0_6 = arith.constant 0 : index
    %15 = arith.index_cast %12 : i32 to index
    %16 = vector.load %arg4[%c0_6, %15] : memref<4x2048xf32, #tpu.memory_space<vmem>>, vector<4x512xf32>
    %17 = vector.broadcast %12 : i32 to vector<4x512xi32>
    %18 = arith.addi %8, %17 : vector<4x512xi32>
    %c2048_i32_7 = arith.constant 2048 : i32
    %19 = vector.broadcast %c2048_i32_7 : i32 to vector<4x512xi32>
    %20 = arith.cmpi slt, %18, %19 : vector<4x512xi32>
    %cst = arith.constant 0.000000e+00 : f32
    %21 = vector.broadcast %cst : f32 to vector<4x512xf32>
    %22 = arith.select %20, %14, %21 : vector<4x512xi1>, vector<4x512xf32>
    %cst_8 = arith.constant 0.000000e+00 : f32
    %23 = vector.broadcast %cst_8 : f32 to vector<4x512xf32>
    %24 = arith.select %20, %16, %23 : vector<4x512xi1>, vector<4x512xf32>
    %25 = arith.subf %22, %24 : vector<4x512xf32>
    %26 = arith.mulf %22, %22 : vector<4x512xf32>
    %27 = arith.addf %9, %26 : vector<4x512xf32>
    %28 = arith.mulf %25, %25 : vector<4x512xf32>
    %29 = arith.addf %10, %28 : vector<4x512xf32>
    %c1_i32_9 = arith.constant 1 : i32
    %c512_i32_10 = arith.constant 512 : i32
    %30 = arith.muli %c1_i32_9, %c512_i32_10 : i32
    %31 = tpu.assume_multiple %30, 512 : i32
    %c0_11 = arith.constant 0 : index
    %32 = arith.index_cast %31 : i32 to index
    %33 = vector.load %arg3[%c0_11, %32] : memref<4x2048xf32, #tpu.memory_space<vmem>>, vector<4x512xf32>
    %c0_12 = arith.constant 0 : index
    %34 = arith.index_cast %31 : i32 to index
    %35 = vector.load %arg4[%c0_12, %34] : memref<4x2048xf32, #tpu.memory_space<vmem>>, vector<4x512xf32>
    %36 = vector.broadcast %31 : i32 to vector<4x512xi32>
    %37 = arith.addi %8, %36 : vector<4x512xi32>
    %c2048_i32_13 = arith.constant 2048 : i32
    %38 = vector.broadcast %c2048_i32_13 : i32 to vector<4x512xi32>
    %39 = arith.cmpi slt, %37, %38 : vector<4x512xi32>
    %cst_14 = arith.constant 0.000000e+00 : f32
    %40 = vector.broadcast %cst_14 : f32 to vector<4x512xf32>
    %41 = arith.select %39, %33, %40 : vector<4x512xi1>, vector<4x512xf32>
    %cst_15 = arith.constant 0.000000e+00 : f32
    %42 = vector.broadcast %cst_15 : f32 to vector<4x512xf32>
    %43 = arith.select %39, %35, %42 : vector<4x512xi1>, vector<4x512xf32>
    %44 = arith.subf %41, %43 : vector<4x512xf32>
    %45 = arith.mulf %41, %41 : vector<4x512xf32>
    %46 = arith.addf %27, %45 : vector<4x512xf32>
    %47 = arith.mulf %44, %44 : vector<4x512xf32>
    %48 = arith.addf %29, %47 : vector<4x512xf32>
    %c2_i32 = arith.constant 2 : i32
    %c512_i32_16 = arith.constant 512 : i32
    %49 = arith.muli %c2_i32, %c512_i32_16 : i32
    %50 = tpu.assume_multiple %49, 512 : i32
    %c0_17 = arith.constant 0 : index
    %51 = arith.index_cast %50 : i32 to index
    %52 = vector.load %arg3[%c0_17, %51] : memref<4x2048xf32, #tpu.memory_space<vmem>>, vector<4x512xf32>
    %c0_18 = arith.constant 0 : index
    %53 = arith.index_cast %50 : i32 to index
    %54 = vector.load %arg4[%c0_18, %53] : memref<4x2048xf32, #tpu.memory_space<vmem>>, vector<4x512xf32>
    %55 = vector.broadcast %50 : i32 to vector<4x512xi32>
    %56 = arith.addi %8, %55 : vector<4x512xi32>
    %c2048_i32_19 = arith.constant 2048 : i32
    %57 = vector.broadcast %c2048_i32_19 : i32 to vector<4x512xi32>
    %58 = arith.cmpi slt, %56, %57 : vector<4x512xi32>
    %cst_20 = arith.constant 0.000000e+00 : f32
    %59 = vector.broadcast %cst_20 : f32 to vector<4x512xf32>
    %60 = arith.select %58, %52, %59 : vector<4x512xi1>, vector<4x512xf32>
    %cst_21 = arith.constant 0.000000e+00 : f32
    %61 = vector.broadcast %cst_21 : f32 to vector<4x512xf32>
    %62 = arith.select %58, %54, %61 : vector<4x512xi1>, vector<4x512xf32>
    %63 = arith.subf %60, %62 : vector<4x512xf32>
    %64 = arith.mulf %60, %60 : vector<4x512xf32>
    %65 = arith.addf %46, %64 : vector<4x512xf32>
    %66 = arith.mulf %63, %63 : vector<4x512xf32>
    %67 = arith.addf %48, %66 : vector<4x512xf32>
    %c3_i32 = arith.constant 3 : i32
    %c512_i32_22 = arith.constant 512 : i32
    %68 = arith.muli %c3_i32, %c512_i32_22 : i32
    %69 = tpu.assume_multiple %68, 512 : i32
    %c0_23 = arith.constant 0 : index
    %70 = arith.index_cast %69 : i32 to index
    %71 = vector.load %arg3[%c0_23, %70] : memref<4x2048xf32, #tpu.memory_space<vmem>>, vector<4x512xf32>
    %c0_24 = arith.constant 0 : index
    %72 = arith.index_cast %69 : i32 to index
    %73 = vector.load %arg4[%c0_24, %72] : memref<4x2048xf32, #tpu.memory_space<vmem>>, vector<4x512xf32>
    %74 = vector.broadcast %69 : i32 to vector<4x512xi32>
    %75 = arith.addi %8, %74 : vector<4x512xi32>
    %c2048_i32_25 = arith.constant 2048 : i32
    %76 = vector.broadcast %c2048_i32_25 : i32 to vector<4x512xi32>
    %77 = arith.cmpi slt, %75, %76 : vector<4x512xi32>
    %cst_26 = arith.constant 0.000000e+00 : f32
    %78 = vector.broadcast %cst_26 : f32 to vector<4x512xf32>
    %79 = arith.select %77, %71, %78 : vector<4x512xi1>, vector<4x512xf32>
    %cst_27 = arith.constant 0.000000e+00 : f32
    %80 = vector.broadcast %cst_27 : f32 to vector<4x512xf32>
    %81 = arith.select %77, %73, %80 : vector<4x512xi1>, vector<4x512xf32>
    %82 = arith.subf %79, %81 : vector<4x512xf32>
    %83 = arith.mulf %79, %79 : vector<4x512xf32>
    %84 = arith.addf %65, %83 : vector<4x512xf32>
    %85 = arith.mulf %82, %82 : vector<4x512xf32>
    %86 = arith.addf %67, %85 : vector<4x512xf32>
    %c4_i32 = arith.constant 4 : i32
    %c0_28 = arith.constant 0 : index
    %c0_29 = arith.constant 0 : index
    %87 = vector.load %arg7[%c0_28, %c0_29] : memref<4x512xf32, #tpu.memory_space<vmem>>, vector<4x512xf32>
    tpu.vector_store %arg7[%c0_28, %c0_29], %84 {strides = array<i32>} : memref<4x512xf32, #tpu.memory_space<vmem>>, vector<4x512xf32>,
    %c0_30 = arith.constant 0 : index
    %c0_31 = arith.constant 0 : index
    %88 = vector.load %arg8[%c0_30, %c0_31] : memref<4x512xf32, #tpu.memory_space<vmem>>, vector<4x512xf32>
    tpu.vector_store %arg8[%c0_30, %c0_31], %86 {strides = array<i32>} : memref<4x512xf32, #tpu.memory_space<vmem>>, vector<4x512xf32>,
    %c0_i32_32 = arith.constant 0 : i32
    %89 = arith.cmpi eq, %arg2, %c0_i32_32 : i32
    %90 = arith.extui %89 : i1 to i32
    %c0_i32_33 = arith.constant 0 : i32
    %91 = arith.cmpi ne, %90, %c0_i32_33 : i32
    scf.if %91 {
      %c0_34 = arith.constant 0 : index
      %c0_35 = arith.constant 0 : index
      %92 = vector.load %arg7[%c0_34, %c0_35] : memref<4x512xf32, #tpu.memory_space<vmem>>, vector<4x512xf32>
      %cst_36 = arith.constant dense<0.000000e+00> : vector<4xf32>
      %93 = vector.multi_reduction <add>, %92, %cst_36 [1] : vector<4x512xf32> to vector<4xf32>
      %94 = vector.shape_cast %93 : vector<4xf32> to vector<4x1xf32>
      %c0_37 = arith.constant 0 : index
      %c0_38 = arith.constant 0 : index
      %c0_39 = arith.constant 0 : index
      %95 = vector.load %arg5[%c0_37, %c0_38, %c0_39] : memref<1x4x1xf32, #tpu.memory_space<vmem>>, vector<1x4x1xf32>
      %96 = vector.shape_cast %95 : vector<1x4x1xf32> to vector<4x1xf32>
      %97 = vector.shape_cast %94 : vector<4x1xf32> to vector<1x4x1xf32>
      tpu.vector_store %arg5[%c0_37, %c0_38, %c0_39], %97 {strides = array<i32>} : memref<1x4x1xf32, #tpu.memory_space<vmem>>, vector<1x4x1xf32>,
      %c0_40 = arith.constant 0 : index
      %c0_41 = arith.constant 0 : index
      %98 = vector.load %arg8[%c0_40, %c0_41] : memref<4x512xf32, #tpu.memory_space<vmem>>, vector<4x512xf32>
      %cst_42 = arith.constant dense<0.000000e+00> : vector<4xf32>
      %99 = vector.multi_reduction <add>, %98, %cst_42 [1] : vector<4x512xf32> to vector<4xf32>
      %100 = vector.shape_cast %99 : vector<4xf32> to vector<4x1xf32>
      %c0_43 = arith.constant 0 : index
      %c0_44 = arith.constant 0 : index
      %c0_45 = arith.constant 0 : index
      %101 = vector.load %arg6[%c0_43, %c0_44, %c0_45] : memref<1x4x1xf32, #tpu.memory_space<vmem>>, vector<1x4x1xf32>
      %102 = vector.shape_cast %101 : vector<1x4x1xf32> to vector<4x1xf32>
      %103 = vector.shape_cast %100 : vector<4x1xf32> to vector<1x4x1xf32>
      tpu.vector_store %arg6[%c0_43, %c0_44, %c0_45], %103 {strides = array<i32>} : memref<1x4x1xf32, #tpu.memory_space<vmem>>, vector<1x4x1xf32>,
    } else {
    }
    return
  }
  func.func @transform_0(%arg0: i32, %arg1: i32, %arg2: i32) -> (i32, i32) {
    %c1_i32 = arith.constant 1 : i32
    %0 = arith.muli %arg1, %c1_i32 : i32
    %1 = arith.addi %0, %arg2 : i32
    %c0_i32 = arith.constant 0 : i32
    %2 = arith.minsi %1, %c0_i32 : i32
    %c0_i32_0 = arith.constant 0 : i32
    return %arg0, %2 : i32, i32
  }
  func.func @transform_1(%arg0: i32, %arg1: i32, %arg2: i32) -> (i32, i32) {
    %c1_i32 = arith.constant 1 : i32
    %0 = arith.muli %arg1, %c1_i32 : i32
    %1 = arith.addi %0, %arg2 : i32
    %c0_i32 = arith.constant 0 : i32
    %2 = arith.minsi %1, %c0_i32 : i32
    %c0_i32_0 = arith.constant 0 : i32
    return %arg0, %2 : i32, i32
  }
  func.func @transform_2(%arg0: i32, %arg1: i32, %arg2: i32) -> (i32, i32, i32) {
    %c0_i32 = arith.constant 0 : i32
    %c0_i32_0 = arith.constant 0 : i32
    return %arg1, %arg0, %c0_i32 : i32, i32, i32
  }
  func.func @transform_3(%arg0: i32, %arg1: i32, %arg2: i32) -> (i32, i32, i32) {
    %c0_i32 = arith.constant 0 : i32
    %c0_i32_0 = arith.constant 0 : i32
    return %arg1, %arg0, %c0_i32 : i32, i32, i32
  }
}

</mosaic_0001>

<llo_original>
// kernel: tpu_custom_call.1
$region0: #{tpu_custom_call.1}
  #allocation0 [shape = 'u32[]', space=smem, size = 0x4, offset = 0x4, fixed_abs, tag = 'smem constant byte address 0x4 - core index']
  #allocation1 [shape = 'u32[144,128]{1,0:T(1,128)}', space=vmem, size = 0x12000, scoped, tag = 'internal scratch']
  #allocation2 [shape = 'f32[4,512]{1,0:T(4,128)}', space=vmem, size = 0x2000, scoped, tag = 'scratch operand']
  #allocation3 [shape = 'f32[4,512]{1,0:T(4,128)}', space=vmem, size = 0x2000, scoped, tag = 'scratch operand']
  %s0 = inlined_call_operand.hbm [shape: f32[4,2048], index: 0, kind: input, shape index: {}]
  %s1 = inlined_call_operand.hbm [shape: f32[4,2048], index: 1, kind: input, shape index: {}]
  %s2 = inlined_call_operand.vmem [shape: f32[1,4,1], index: 2, kind: output, shape index: {0}]
  %s3 = inlined_call_operand.vmem [shape: f32[1,4,1], index: 3, kind: output, shape index: {1}]
  %4 = xla_tuple %s2, %s3
  %s5 = sld [smem:[#allocation0]]
  $region42: #{tpu_custom_call.1} parent=0
    _
  %s7 = ssub.s32 1, %s5
  %s8 = scalar_select 0, %s7, %s5
  $region1: #{tpu_custom_call.1} parent=0
    #allocation4 [shape = 'u8[32768]{0}', space=vmem, size = 0x8000, scoped, tag = 'input window, operand 0, single buffered']
    #allocation5 [shape = 's32[1]{0}', space=sflag, size = 0x4, scoped, tag = 'scoped memory for tpu_custom_call.1']
    #allocation6 [shape = 'u8[32768]{0}', space=vmem, size = 0x8000, scoped, tag = 'input window, operand 1, single buffered']
    #allocation7 [shape = 's32[1]{0}', space=sflag, size = 0x4, scoped, tag = 'scoped memory for tpu_custom_call.1']
    %9 = vsyncpa [#allocation5], 0
    %10 = vsyncpa [#allocation7], 0
    // Predicated region
    $region2: #{tpu_custom_call.1} parent=1 // pred_check
      _
    $region3: #{tpu_custom_call.1} parent=1 // pred_check_branch
      %12 = sbr.rel (0) target = $region5
    $region4: #{tpu_custom_call.1} parent=1 // pred_region
      %s13 = sadd.s32 0, 0
      %p14 = scmp.lt.s32.totalorder %s13, 0
      %s15 = scalar_select %p14, %s13, 0
      %s16 = smul.u32 16, %s15
      %s18 = ssub.s32 1024, 1024
      %19 = vsyncadd [#allocation5], %s18
      %s20 = smul.addr %s16, 64
      %s21 = scalar_lea.hbm %s0, %s20
      %s23 = sshll.u32 [#allocation4], 4
      %s24 = int_to_ptr.vmem [resolvable:$true] %s23
      %26 = dma.hbm_to_vmem [thread:$0]  %s21, 1024, %s24, [#allocation5]
    $region5: #{tpu_custom_call.1} parent=1 // pred_fallthru
      _
    // Predicated region
    $region6: #{tpu_custom_call.1} parent=1 // pred_check
      _
    $region7: #{tpu_custom_call.1} parent=1 // pred_check_branch
      %28 = sbr.rel (0) target = $region9
    $region8: #{tpu_custom_call.1} parent=1 // pred_region
      %s29 = sadd.s32 0, 0
      %p30 = scmp.lt.s32.totalorder %s29, 0
      %s31 = scalar_select %p30, %s29, 0
      %s32 = smul.u32 16, %s31
      %s34 = ssub.s32 1024, 1024
      %35 = vsyncadd [#allocation7], %s34
      %s36 = smul.addr %s32, 64
      %s37 = scalar_lea.hbm %s1, %s36
      %s39 = sshll.u32 [#allocation6], 4
      %s40 = int_to_ptr.vmem [resolvable:$true] %s39
      %42 = dma.hbm_to_vmem [thread:$0]  %s37, 1024, %s40, [#allocation7]
    $region9: #{tpu_custom_call.1} parent=1 // pred_fallthru
      _
    // Predicated region
    $region10: #{tpu_custom_call.1} parent=1 // pred_check
      _
    $region11: #{tpu_custom_call.1} parent=1 // pred_check_branch
      %44 = sbr.rel (0) target = $region13
    $region12: #{tpu_custom_call.1} parent=1 // pred_region
      %45 = dma.done [#allocation5], 1024
    $region13: #{tpu_custom_call.1} parent=1 // pred_fallthru
      _
    // Predicated region
    $region14: #{tpu_custom_call.1} parent=1 // pred_check
      _
    $region15: #{tpu_custom_call.1} parent=1 // pred_check_branch
      %47 = sbr.rel (0) target = $region17
    $region16: #{tpu_custom_call.1} parent=1 // pred_region
      %48 = dma.done [#allocation7], 1024
    $region17: #{tpu_custom_call.1} parent=1 // pred_fallthru
      _
    %s49 = sadd.s32 0, 0
    %p50 = scmp.lt.s32.totalorder %s49, 0
    %s51 = scalar_select %p50, %s49, 0
    %s52 = smul.u32 16, %s51
    %s53 = sadd.s32 0, 0
    %p54 = scmp.lt.s32.totalorder %s53, 0
    %s55 = scalar_select %p54, %s53, 0
    %s56 = smul.u32 16, %s55
    %p57 = scmp.eq.s32.totalorder 0, 0
    // Predicated region
    $region18: #{tpu_custom_call.1} parent=1 // pred_check
      %p58 = pneg %p57
    $region19: #{tpu_custom_call.1} parent=1 // pred_check_branch
      %60 = sbr.rel (%p58) target = $region21
    $region20: #{tpu_custom_call.1} parent=1 // pred_region
      %61 = vst [vmem:[#allocation2] sm:$0xff] 0.0
      %62 = vst [vmem:[#allocation2 + $0x8] sm:$0xff] 0.0
      %63 = vst [vmem:[#allocation3] sm:$0xff] 0.0
      %64 = vst [vmem:[#allocation3 + $0x8] sm:$0xff] 0.0
    $region21: #{tpu_custom_call.1} parent=1 // pred_fallthru
      _
    %s65 = sadd.s32 0, 0
    %s66 = smul.u32 %s65, 2048
    %v67 = vlaneseq
    %v68 = vand.u32 %v67, 127
    %v69 = vadd.s32 %v68, 128
    %v70 = vadd.s32 %v68, 256
    %v71 = vadd.s32 %v68, 384
    %v72 = vstv %s66
    %v73 = vadd.s32 %v72, %v68
    %v74 = vadd.s32 %v72, %v69
    %v75 = vadd.s32 %v72, %v70
    %v76 = vadd.s32 %v72, %v71
    %v77 = vld [vmem:[#allocation2] sm:$0xff]
    %v78 = vld [vmem:[#allocation2 + $0x8] sm:$0xff]
    %v79 = vld [vmem:[#allocation3] sm:$0xff]
    %v80 = vld [vmem:[#allocation3 + $0x8] sm:$0xff]
    %v81 = vld [vmem:[#allocation4] sm:$0xff]
    %v82 = vld [vmem:[#allocation4 + $0x8] sm:$0xff]
    %v83 = vld [vmem:[#allocation6] sm:$0xff]
    %v84 = vld [vmem:[#allocation6 + $0x8] sm:$0xff]
    %v85 = vstv 0
    %v86 = vadd.s32 %v73, %v85
    %v87 = vadd.s32 %v74, %v85
    %v88 = vadd.s32 %v75, %v85
    %v89 = vadd.s32 %v76, %v85
    %vm90 = vcmp.lt.s32.totalorder %v86, 2048
    %vm91 = vcmp.lt.s32.totalorder %v87, 2048
    %vm92 = vcmp.lt.s32.totalorder %v88, 2048
    %vm93 = vcmp.lt.s32.totalorder %v89, 2048
    %v96 = vcombine.high %v81, %v81
    %v97 = vcombine.high %v82, %v82
    %v100 = vsel %vm90, %v81, 0.0
    %v101 = vsel %vm91, %v96, 0.0
    %v102 = vsel %vm92, %v82, 0.0
    %v103 = vsel %vm93, %v97, 0.0
    %v106 = vcombine.high %v83, %v83
    %v107 = vcombine.high %v84, %v84
    %v110 = vsel %vm90, %v83, 0.0
    %v111 = vsel %vm91, %v106, 0.0
    %v112 = vsel %vm92, %v84, 0.0
    %v113 = vsel %vm93, %v107, 0.0
    %v114 = vsub.f32 %v100, %v110
    %v115 = vsub.f32 %v101, %v111
    %v116 = vsub.f32 %v102, %v112
    %v117 = vsub.f32 %v103, %v113
    %v118 = vmul.f32 %v100, %v100
    %v119 = vmul.f32 %v101, %v101
    %v120 = vmul.f32 %v102, %v102
    %v121 = vmul.f32 %v103, %v103
    %v126 = vcombine.low %v118, %v119
    %v127 = vcombine.low %v120, %v121
    %v130 = vadd.f32 %v77, %v126
    %v131 = vadd.f32 %v78, %v127
    %v132 = vmul.f32 %v114, %v114
    %v133 = vmul.f32 %v115, %v115
    %v134 = vmul.f32 %v116, %v116
    %v135 = vmul.f32 %v117, %v117
    %v140 = vcombine.low %v132, %v133
    %v141 = vcombine.low %v134, %v135
    %v144 = vadd.f32 %v79, %v140
    %v145 = vadd.f32 %v80, %v141
    %s146 = scalar_lea.vmem [#allocation4], 16
    %v147 = vld [vmem:[%s146] sm:$0xff]
    %v148 = vld [vmem:[%s146 + $0x8] sm:$0xff]
    %s149 = scalar_lea.vmem [#allocation6], 16
    %v150 = vld [vmem:[%s149] sm:$0xff]
    %v151 = vld [vmem:[%s149 + $0x8] sm:$0xff]
    %v152 = vstv 512
    %v153 = vadd.s32 %v73, %v152
    %v154 = vadd.s32 %v74, %v152
    %v155 = vadd.s32 %v75, %v152
    %v156 = vadd.s32 %v76, %v152
    %vm157 = vcmp.lt.s32.totalorder %v153, 2048
    %vm158 = vcmp.lt.s32.totalorder %v154, 2048
    %vm159 = vcmp.lt.s32.totalorder %v155, 2048
    %vm160 = vcmp.lt.s32.totalorder %v156, 2048
    %v163 = vcombine.high %v147, %v147
    %v164 = vcombine.high %v148, %v148
    %v167 = vsel %vm157, %v147, 0.0
    %v168 = vsel %vm158, %v163, 0.0
    %v169 = vsel %vm159, %v148, 0.0
    %v170 = vsel %vm160, %v164, 0.0
    %v173 = vcombine.high %v150, %v150
    %v174 = vcombine.high %v151, %v151
    %v177 = vsel %vm157, %v150, 0.0
    %v178 = vsel %vm158, %v173, 0.0
    %v179 = vsel %vm159, %v151, 0.0
    %v180 = vsel %vm160, %v174, 0.0
    %v181 = vsub.f32 %v167, %v177
    %v182 = vsub.f32 %v168, %v178
    %v183 = vsub.f32 %v169, %v179
    %v184 = vsub.f32 %v170, %v180
    %v185 = vmul.f32 %v167, %v167
    %v186 = vmul.f32 %v168, %v168
    %v187 = vmul.f32 %v169, %v169
    %v188 = vmul.f32 %v170, %v170
    %v193 = vcombine.low %v185, %v186
    %v194 = vcombine.low %v187, %v188
    %v197 = vadd.f32 %v130, %v193
    %v198 = vadd.f32 %v131, %v194
    %v199 = vmul.f32 %v181, %v181
    %v200 = vmul.f32 %v182, %v182
    %v201 = vmul.f32 %v183, %v183
    %v202 = vmul.f32 %v184, %v184
    %v207 = vcombine.low %v199, %v200
    %v208 = vcombine.low %v201, %v202
    %v211 = vadd.f32 %v144, %v207
    %v212 = vadd.f32 %v145, %v208
    %s213 = scalar_lea.vmem [#allocation4], 32
    %v214 = vld [vmem:[%s213] sm:$0xff]
    %v215 = vld [vmem:[%s213 + $0x8] sm:$0xff]
    %s216 = scalar_lea.vmem [#allocation6], 32
    %v217 = vld [vmem:[%s216] sm:$0xff]
    %v218 = vld [vmem:[%s216 + $0x8] sm:$0xff]
    %v219 = vstv 1024
    %v220 = vadd.s32 %v73, %v219
    %v221 = vadd.s32 %v74, %v219
    %v222 = vadd.s32 %v75, %v219
    %v223 = vadd.s32 %v76, %v219
    %vm224 = vcmp.lt.s32.totalorder %v220, 2048
    %vm225 = vcmp.lt.s32.totalorder %v221, 2048
    %vm226 = vcmp.lt.s32.totalorder %v222, 2048
    %vm227 = vcmp.lt.s32.totalorder %v223, 2048
    %v230 = vcombine.high %v214, %v214
    %v231 = vcombine.high %v215, %v215
    %v234 = vsel %vm224, %v214, 0.0
    %v235 = vsel %vm225, %v230, 0.0
    %v236 = vsel %vm226, %v215, 0.0
    %v237 = vsel %vm227, %v231, 0.0
    %v240 = vcombine.high %v217, %v217
    %v241 = vcombine.high %v218, %v218
    %v244 = vsel %vm224, %v217, 0.0
    %v245 = vsel %vm225, %v240, 0.0
    %v246 = vsel %vm226, %v218, 0.0
    %v247 = vsel %vm227, %v241, 0.0
    %v248 = vsub.f32 %v234, %v244
    %v249 = vsub.f32 %v235, %v245
    %v250 = vsub.f32 %v236, %v246
    %v251 = vsub.f32 %v237, %v247
    %v252 = vmul.f32 %v234, %v234
    %v253 = vmul.f32 %v235, %v235
    %v254 = vmul.f32 %v236, %v236
    %v255 = vmul.f32 %v237, %v237
    %v260 = vcombine.low %v252, %v253
    %v261 = vcombine.low %v254, %v255
    %v264 = vadd.f32 %v197, %v260
    %v265 = vadd.f32 %v198, %v261
    %v266 = vmul.f32 %v248, %v248
    %v267 = vmul.f32 %v249, %v249
    %v268 = vmul.f32 %v250, %v250
    %v269 = vmul.f32 %v251, %v251
    %v274 = vcombine.low %v266, %v267
    %v275 = vcombine.low %v268, %v269
    %v278 = vadd.f32 %v211, %v274
    %v279 = vadd.f32 %v212, %v275
    %s280 = scalar_lea.vmem [#allocation4], 48
    %v281 = vld [vmem:[%s280] sm:$0xff]
    %v282 = vld [vmem:[%s280 + $0x8] sm:$0xff]
    %s283 = scalar_lea.vmem [#allocation6], 48
    %v284 = vld [vmem:[%s283] sm:$0xff]
    %v285 = vld [vmem:[%s283 + $0x8] sm:$0xff]
    %v286 = vstv 1536
    %v287 = vadd.s32 %v73, %v286
    %v288 = vadd.s32 %v74, %v286
    %v289 = vadd.s32 %v75, %v286
    %v290 = vadd.s32 %v76, %v286
    %vm291 = vcmp.lt.s32.totalorder %v287, 2048
    %vm292 = vcmp.lt.s32.totalorder %v288, 2048
    %vm293 = vcmp.lt.s32.totalorder %v289, 2048
    %vm294 = vcmp.lt.s32.totalorder %v290, 2048
    %v297 = vcombine.high %v281, %v281
    %v298 = vcombine.high %v282, %v282
    %v301 = vsel %vm291, %v281, 0.0
    %v302 = vsel %vm292, %v297, 0.0
    %v303 = vsel %vm293, %v282, 0.0
    %v304 = vsel %vm294, %v298, 0.0
    %v307 = vcombine.high %v284, %v284
    %v308 = vcombine.high %v285, %v285
    %v311 = vsel %vm291, %v284, 0.0
    %v312 = vsel %vm292, %v307, 0.0
    %v313 = vsel %vm293, %v285, 0.0
    %v314 = vsel %vm294, %v308, 0.0
    %v315 = vsub.f32 %v301, %v311
    %v316 = vsub.f32 %v302, %v312
    %v317 = vsub.f32 %v303, %v313
    %v318 = vsub.f32 %v304, %v314
    %v319 = vmul.f32 %v301, %v301
    %v320 = vmul.f32 %v302, %v302
    %v321 = vmul.f32 %v303, %v303
    %v322 = vmul.f32 %v304, %v304
    %v327 = vcombine.low %v319, %v320
    %v328 = vcombine.low %v321, %v322
    %v331 = vadd.f32 %v264, %v327
    %v332 = vadd.f32 %v265, %v328
    %v333 = vmul.f32 %v315, %v315
    %v334 = vmul.f32 %v316, %v316
    %v335 = vmul.f32 %v317, %v317
    %v336 = vmul.f32 %v318, %v318
    %v341 = vcombine.low %v333, %v334
    %v342 = vcombine.low %v335, %v336
    %v345 = vadd.f32 %v278, %v341
    %v346 = vadd.f32 %v279, %v342
    %347 = vst [vmem:[#allocation2] sm:$0xff] %v331
    %348 = vst [vmem:[#allocation2 + $0x8] sm:$0xff] %v332
    %349 = vst [vmem:[#allocation3] sm:$0xff] %v345
    %350 = vst [vmem:[#allocation3 + $0x8] sm:$0xff] %v346
    // Predicated region
    $region22: #{tpu_custom_call.1} parent=1 // pred_check
      %p351 = pneg %p57
    $region23: #{tpu_custom_call.1} parent=1 // pred_check_branch
      %353 = sbr.rel (%p351) target = $region25
    $region24: #{tpu_custom_call.1} parent=1 // pred_region
      %v354 = vld [vmem:[#allocation2] sm:$0xff]
      %v355 = vld [vmem:[#allocation2 + $0x8] sm:$0xff]
      %v358 = vcombine.high %v354, %v354
      %v359 = vcombine.high %v355, %v355
      %vm362 = vcmask 1043456
      %v363 = vsel %vm362, %v354, 0.0
      %v364 = vsel %vm362, %v358, 0.0
      %v365 = vadd.f32 %v363, %v364
      %v366 = vsel %vm362, %v355, 0.0
      %v367 = vadd.f32 %v365, %v366
      %v368 = vsel %vm362, %v359, 0.0
      %v369 = vadd.f32 %v367, %v368
      %370 = vadd.xlane.f32.xlu0 %v369
      %v371 = vpop.xlane.xlu0 %370
      %vm372 = vcmask 3072
      %373 = vst.msk [vmem:[%s2] sm:$0xf] %vm372, %v371
      %v374 = vld [vmem:[#allocation3] sm:$0xff]
      %v375 = vld [vmem:[#allocation3 + $0x8] sm:$0xff]
      %v378 = vcombine.high %v374, %v374
      %v379 = vcombine.high %v375, %v375
      %v382 = vsel %vm362, %v374, 0.0
      %v383 = vsel %vm362, %v378, 0.0
      %v384 = vadd.f32 %v382, %v383
      %v385 = vsel %vm362, %v375, 0.0
      %v386 = vadd.f32 %v384, %v385
      %v387 = vsel %vm362, %v379, 0.0
      %v388 = vadd.f32 %v386, %v387
      %389 = vadd.xlane.f32.xlu0 %v388
      %v390 = vpop.xlane.xlu0 %389
      %391 = vst.msk [vmem:[%s3] sm:$0xf] %vm372, %v390
    $region25: #{tpu_custom_call.1} parent=1 // pred_fallthru
      _
    // Predicated region
    $region26: #{tpu_custom_call.1} parent=1 // pred_check
      _
    $region27: #{tpu_custom_call.1} parent=1 // pred_check_branch
      %393 = sbr.rel (0) target = $region29
    $region28: #{tpu_custom_call.1} parent=1 // pred_region
      _
    $region29: #{tpu_custom_call.1} parent=1 // pred_fallthru
      _
    // Predicated region
    $region30: #{tpu_custom_call.1} parent=1 // pred_check
      _
    $region31: #{tpu_custom_call.1} parent=1 // pred_check_branch
      %395 = sbr.rel (0) target = $region33
    $region32: #{tpu_custom_call.1} parent=1 // pred_region
      _
    $region33: #{tpu_custom_call.1} parent=1 // pred_fallthru
      _
    // Predicated region
    $region34: #{tpu_custom_call.1} parent=1 // pred_check
      _
    $region35: #{tpu_custom_call.1} parent=1 // pred_check_branch
      %397 = sbr.rel (0) target = $region37
    $region36: #{tpu_custom_call.1} parent=1 // pred_region
      _
    $region37: #{tpu_custom_call.1} parent=1 // pred_fallthru
      _
    // Predicated region
    $region38: #{tpu_custom_call.1} parent=1 // pred_check
      _
    $region39: #{tpu_custom_call.1} parent=1 // pred_check_branch
      %399 = sbr.rel (0) target = $region41
    $region40: #{tpu_custom_call.1} parent=1 // pred_region
      _
    $region41: #{tpu_custom_call.1} parent=1 // pred_fallthru
      _
    %400 = vsyncpa [#allocation5], 1
    %401 = vsyncpa [#allocation7], 1

</llo_original>
